<compile_context>
chip_gen: v6e
topology: v6e:2x2x1
jax: 0.10.0
libtpu: 0.0.40
codegen_flags: <defaults>
</compile_context>

<pallas_src>
import functools

import jax
import jax.numpy as jnp
from jax.experimental import pallas as pl
from jax.experimental.pallas import tpu as pltpu


# ----------------------------------------------------------------------------
# Pallas kernel: fused 2-layer RGCN encoder, single grid step
# ----------------------------------------------------------------------------
def fused_rgcn_encoder_kernel(adj_ref, x_ref,
                              w1_ref, root1_ref, b1_ref,
                              w2_ref, root2_ref, b2_ref,
                              out_ref, *, num_relations):
    adj = adj_ref[...]                      # (N, R*N)  row-normalized [A_0 | A_1 | ...]
    x = x_ref[...]                          # (N, Cp)

    def layer(xin, w_ref, root_ref, b_ref):
        # messages for all relations, stacked along sublane axis:
        #   M[r*N:(r+1)*N, :] = xin @ Wbd[r]
        parts = [jnp.dot(xin, w_ref[r], preferred_element_type=jnp.float32)
                 for r in range(num_relations)]
        m = jnp.concatenate(parts, axis=0)  # (R*N, Cp), tile-aligned pieces
        return (jnp.dot(xin, root_ref[...], preferred_element_type=jnp.float32)
                + b_ref[...]
                + jnp.dot(adj, m, preferred_element_type=jnp.float32))

    h = jnp.maximum(layer(x, w1_ref, root1_ref, b1_ref), 0.0)
    # TODO(synk): F.dropout(p=0.2, training=True) omitted — eval-mode identity;
    # training parity would need pltpu.prng_seed / pltpu.prng_random_bits masking.
    out = layer(h, w2_ref, root2_ref, b2_ref)
    out_ref[...] = out.astype(out_ref.dtype)


# ----------------------------------------------------------------------------
# Wrapper: fold block-diagonal weights, pad to lane-dense hidden, call Pallas
# ----------------------------------------------------------------------------
def _pad_axis(a, axis, target):
    pad = target - a.shape[axis]
    if pad == 0:
        return a
    widths = [(0, 0)] * a.ndim
    widths[axis] = (0, pad)
    return jnp.pad(a, widths)


def fold_block_diagonal(w):
    """(R, B, Cb, Cb) block weights -> dense block-diagonal (R, B*Cb, B*Cb)."""
    R, B, Cb, _ = w.shape
    C = B * Cb
    out = jnp.zeros((R, C, C), w.dtype)
    for b in range(B):
        out = out.at[:, b * Cb:(b + 1) * Cb, b * Cb:(b + 1) * Cb].set(w[:, b])
    return out


def rgcn_encoder_pallas(node_emb, adj, params):
    """node_emb: (N, C); adj: (R, N, N) row-normalized per-relation adjacency."""
    N, C = node_emb.shape
    R = adj.shape[0]
    Cp = ((C + 127) // 128) * 128            # lane-dense hidden (40 -> 128)

    # [A_0 | A_1 | ... | A_{R-1}] : (N, R*N)
    adj_flat = jnp.transpose(adj, (1, 0, 2)).reshape(N, R * N)

    x_p = _pad_axis(node_emb, 1, Cp)

    def prep(w, root, bias):
        wbd = fold_block_diagonal(w)                         # (R, C, C)
        wbd = _pad_axis(_pad_axis(wbd, 1, Cp), 2, Cp)        # (R, Cp, Cp)
        root_p = _pad_axis(_pad_axis(root, 0, Cp), 1, Cp)    # (Cp, Cp)
        bias_p = _pad_axis(bias, 1, Cp)                      # (1, Cp)
        return wbd, root_p, bias_p

    w1, root1, b1 = prep(params["w1"], params["root1"], params["bias1"])
    w2, root2, b2 = prep(params["w2"], params["root2"], params["bias2"])

    kernel = functools.partial(fused_rgcn_encoder_kernel, num_relations=R)

    out_p = pl.pallas_call(
        kernel,
        out_shape=jax.ShapeDtypeStruct((N, Cp), jnp.float32),
        grid_spec=pltpu.PrefetchScalarGridSpec(
            num_scalar_prefetch=0,
            grid=(1,),
            in_specs=[
                pl.BlockSpec((N, R * N), lambda i: (0, 0)),      # adj_flat
                pl.BlockSpec((N, Cp), lambda i: (0, 0)),         # x
                pl.BlockSpec((R, Cp, Cp), lambda i: (0, 0, 0)),  # W1 (folded)
                pl.BlockSpec((Cp, Cp), lambda i: (0, 0)),        # root1
                pl.BlockSpec((1, Cp), lambda i: (0, 0)),         # bias1
                pl.BlockSpec((R, Cp, Cp), lambda i: (0, 0, 0)),  # W2 (folded)
                pl.BlockSpec((Cp, Cp), lambda i: (0, 0)),        # root2
                pl.BlockSpec((1, Cp), lambda i: (0, 0)),         # bias2
            ],
            out_specs=pl.BlockSpec((N, Cp), lambda i: (0, 0)),
        ),
        compiler_params=pltpu.CompilerParams(
            dimension_semantics=("arbitrary",)),
    )(adj_flat, x_p, w1, root1, b1, w2, root2, b2)

    return out_p[:, :C]


# ----------------------------------------------------------------------------
# Plain-JAX glue: dense row-normalized per-relation adjacency (scatter-mean)
# ----------------------------------------------------------------------------
def build_relation_adjacency(edge_index, edge_type, num_nodes, num_relations):
    # PyG convention: edge_index[0]=source, edge_index[1]=target; mean at target.
    src, dst = edge_index[0], edge_index[1]
    adj = jnp.zeros((num_relations, num_nodes, num_nodes), jnp.float32)
    adj = adj.at[edge_type, dst, src].add(1.0)
    deg = adj.sum(axis=2, keepdims=True)
    return adj / jnp.maximum(deg, 1.0)


# ----------------------------------------------------------------------------
# Pure-JAX reference for verification
# ----------------------------------------------------------------------------
def rgcn_conv_ref(x, adj, weight, root, bias):
    N, C = x.shape
    R, B, Cb, _ = weight.shape
    out = x @ root + bias
    for r in range(R):
        h = (adj[r] @ x).reshape(N, B, Cb)
        out = out + jnp.einsum("nbc,bcd->nbd", h, weight[r]).reshape(N, C)
    return out


def rgcn_encoder_ref(node_emb, adj, params):
    x = jnp.maximum(
        rgcn_conv_ref(node_emb, adj, params["w1"], params["root1"], params["bias1"]),
        0.0)
    return rgcn_conv_ref(x, adj, params["w2"], params["root2"], params["bias2"])


# ----------------------------------------------------------------------------
# Deterministic parameter / input construction
# ----------------------------------------------------------------------------
def glorot_uniform(key, shape, fan_in, fan_out):
    limit = (6.0 / (fan_in + fan_out)) ** 0.5
    return jax.random.uniform(key, shape, jnp.float32, -limit, limit)


if __name__ == "__main__":
    NUM_NODES = 16
    HIDDEN = 40           # divisible by num_blocks=5
    NUM_RELATIONS = 3
    NUM_BLOCKS = 5
    CB = HIDDEN // NUM_BLOCKS
    NUM_EDGES = 48

    key = jax.random.PRNGKey(0)
    keys = jax.random.split(key, 8)

    # Synthetic deterministic graph
    src = jax.random.randint(keys[0], (NUM_EDGES,), 0, NUM_NODES)
    dst = jax.random.randint(keys[1], (NUM_EDGES,), 0, NUM_NODES)
    edge_index = jnp.stack([src, dst])                       # (2, E)
    edge_type = jax.random.randint(keys[2], (NUM_EDGES,), 0, NUM_RELATIONS)

    # Synthetic deterministic parameters
    node_emb = glorot_uniform(keys[3], (NUM_NODES, HIDDEN), NUM_NODES, HIDDEN)
    params = {
        "w1": glorot_uniform(keys[4], (NUM_RELATIONS, NUM_BLOCKS, CB, CB), CB, CB),
        "root1": glorot_uniform(keys[5], (HIDDEN, HIDDEN), HIDDEN, HIDDEN),
        "bias1": jnp.zeros((1, HIDDEN), jnp.float32),
        "w2": glorot_uniform(keys[6], (NUM_RELATIONS, NUM_BLOCKS, CB, CB), CB, CB),
        "root2": glorot_uniform(keys[7], (HIDDEN, HIDDEN), HIDDEN, HIDDEN),
        "bias2": jnp.zeros((1, HIDDEN), jnp.float32),
    }

    adj = build_relation_adjacency(edge_index, edge_type, NUM_NODES, NUM_RELATIONS)

    out = rgcn_encoder_pallas(node_emb, adj, params)
    out = jax.block_until_ready(out)

    ref = rgcn_encoder_ref(node_emb, adj, params)
    assert out.shape == (NUM_NODES, HIDDEN)
    assert jnp.allclose(out, ref, rtol=1e-3, atol=1e-3), "mismatch vs reference"

    print("KERNEL_OK")
</pallas_src>

<mosaic_0001>
module attributes {stable_mosaic.version = 11 : i64} {
  func.func @fused_rgcn_encoder_kernel(%arg0: i32, %arg1: memref<16x48xf32, #tpu.memory_space<vmem>>, %arg2: memref<16x128xf32, #tpu.memory_space<vmem>>, %arg3: memref<3x128x128xf32, #tpu.memory_space<vmem>>, %arg4: memref<128x128xf32, #tpu.memory_space<vmem>>, %arg5: memref<1x128xf32, #tpu.memory_space<vmem>>, %arg6: memref<3x128x128xf32, #tpu.memory_space<vmem>>, %arg7: memref<128x128xf32, #tpu.memory_space<vmem>>, %arg8: memref<1x128xf32, #tpu.memory_space<vmem>>, %arg9: memref<16x128xf32, #tpu.memory_space<vmem>>) attributes {dimension_semantics = [#tpu.dimension_semantics<arbitrary>], iteration_bounds = array<i64: 1>, scalar_prefetch = 0 : i64, scratch_operands = 0 : i64, tpu.core_type = #tpu.core_type<tc>, window_params = [{pipeline_mode = #tpu.pipeline_mode<synchronous>, transform_indices = @transform_0, window_bounds = array<i64: 16, 48>}, {pipeline_mode = #tpu.pipeline_mode<synchronous>, transform_indices = @transform_1, window_bounds = array<i64: 16, 128>}, {pipeline_mode = #tpu.pipeline_mode<synchronous>, transform_indices = @transform_2, window_bounds = array<i64: 3, 128, 128>}, {pipeline_mode = #tpu.pipeline_mode<synchronous>, transform_indices = @transform_3, window_bounds = array<i64: 128, 128>}, {pipeline_mode = #tpu.pipeline_mode<synchronous>, transform_indices = @transform_4, window_bounds = array<i64: 1, 128>}, {pipeline_mode = #tpu.pipeline_mode<synchronous>, transform_indices = @transform_5, window_bounds = array<i64: 3, 128, 128>}, {pipeline_mode = #tpu.pipeline_mode<synchronous>, transform_indices = @transform_6, window_bounds = array<i64: 128, 128>}, {pipeline_mode = #tpu.pipeline_mode<synchronous>, transform_indices = @transform_7, window_bounds = array<i64: 1, 128>}, {pipeline_mode = #tpu.pipeline_mode<synchronous>, transform_indices = @transform_8, window_bounds = array<i64: 16, 128>}]} {
    %c0 = arith.constant 0 : index
    %c0_0 = arith.constant 0 : index
    %0 = vector.load %arg1[%c0, %c0_0] : memref<16x48xf32, #tpu.memory_space<vmem>>, vector<16x48xf32>
    %c0_1 = arith.constant 0 : index
    %c0_2 = arith.constant 0 : index
    %1 = vector.load %arg2[%c0_1, %c0_2] : memref<16x128xf32, #tpu.memory_space<vmem>>, vector<16x128xf32>
    %c0_3 = arith.constant 0 : index
    %c0_4 = arith.constant 0 : index
    %c0_5 = arith.constant 0 : index
    %2 = vector.load %arg3[%c0_3, %c0_4, %c0_5] : memref<3x128x128xf32, #tpu.memory_space<vmem>>, vector<1x128x128xf32>
    %3 = vector.shape_cast %2 : vector<1x128x128xf32> to vector<128x128xf32>
    %cst = arith.constant dense<0.000000e+00> : vector<16x128xf32>
    %4 = tpu.matmul %1, %3, %cst {dimension_numbers = #tpu.dot_dimension_numbers<[1], [0], [0], [1], [0, 0, 1, 1], [], []>} : vector<16x128xf32>, vector<128x128xf32>, vector<16x128xf32> -> vector<16x128xf32>
    %c1 = arith.constant 1 : index
    %c0_6 = arith.constant 0 : index
    %c0_7 = arith.constant 0 : index
    %5 = vector.load %arg3[%c1, %c0_6, %c0_7] : memref<3x128x128xf32, #tpu.memory_space<vmem>>, vector<1x128x128xf32>
    %6 = vector.shape_cast %5 : vector<1x128x128xf32> to vector<128x128xf32>
    %cst_8 = arith.constant dense<0.000000e+00> : vector<16x128xf32>
    %7 = tpu.matmul %1, %6, %cst_8 {dimension_numbers = #tpu.dot_dimension_numbers<[1], [0], [0], [1], [0, 0, 1, 1], [], []>} : vector<16x128xf32>, vector<128x128xf32>, vector<16x128xf32> -> vector<16x128xf32>
    %c2 = arith.constant 2 : index
    %c0_9 = arith.constant 0 : index
    %c0_10 = arith.constant 0 : index
    %8 = vector.load %arg3[%c2, %c0_9, %c0_10] : memref<3x128x128xf32, #tpu.memory_space<vmem>>, vector<1x128x128xf32>
    %9 = vector.shape_cast %8 : vector<1x128x128xf32> to vector<128x128xf32>
    %cst_11 = arith.constant dense<0.000000e+00> : vector<16x128xf32>
    %10 = tpu.matmul %1, %9, %cst_11 {dimension_numbers = #tpu.dot_dimension_numbers<[1], [0], [0], [1], [0, 0, 1, 1], [], []>} : vector<16x128xf32>, vector<128x128xf32>, vector<16x128xf32> -> vector<16x128xf32>
    %11 = tpu.concatenate %4, %7, %10 in 0 : vector<16x128xf32>, vector<16x128xf32>, vector<16x128xf32> -> vector<48x128xf32>
    %c0_12 = arith.constant 0 : index
    %c0_13 = arith.constant 0 : index
    %12 = vector.load %arg4[%c0_12, %c0_13] : memref<128x128xf32, #tpu.memory_space<vmem>>, vector<128x128xf32>
    %cst_14 = arith.constant dense<0.000000e+00> : vector<16x128xf32>
    %13 = tpu.matmul %1, %12, %cst_14 {dimension_numbers = #tpu.dot_dimension_numbers<[1], [0], [0], [1], [0, 0, 1, 1], [], []>} : vector<16x128xf32>, vector<128x128xf32>, vector<16x128xf32> -> vector<16x128xf32>
    %c0_15 = arith.constant 0 : index
    %c0_16 = arith.constant 0 : index
    %14 = vector.load %arg5[%c0_15, %c0_16] : memref<1x128xf32, #tpu.memory_space<vmem>>, vector<1x128xf32>
    %15 = vector.broadcast %14 : vector<1x128xf32> to vector<16x128xf32>
    %16 = arith.addf %13, %15 : vector<16x128xf32>
    %cst_17 = arith.constant dense<0.000000e+00> : vector<16x128xf32>
    %17 = tpu.matmul %0, %11, %cst_17 {dimension_numbers = #tpu.dot_dimension_numbers<[1], [0], [0], [1], [0, 0, 1, 1], [], []>} : vector<16x48xf32>, vector<48x128xf32>, vector<16x128xf32> -> vector<16x128xf32>
    %18 = arith.addf %16, %17 : vector<16x128xf32>
    %cst_18 = arith.constant 0.000000e+00 : f32
    %19 = vector.broadcast %cst_18 : f32 to vector<16x128xf32>
    %20 = arith.maximumf %18, %19 : vector<16x128xf32>
    %c0_19 = arith.constant 0 : index
    %c0_20 = arith.constant 0 : index
    %c0_21 = arith.constant 0 : index
    %21 = vector.load %arg6[%c0_19, %c0_20, %c0_21] : memref<3x128x128xf32, #tpu.memory_space<vmem>>, vector<1x128x128xf32>
    %22 = vector.shape_cast %21 : vector<1x128x128xf32> to vector<128x128xf32>
    %cst_22 = arith.constant dense<0.000000e+00> : vector<16x128xf32>
    %23 = tpu.matmul %20, %22, %cst_22 {dimension_numbers = #tpu.dot_dimension_numbers<[1], [0], [0], [1], [0, 0, 1, 1], [], []>} : vector<16x128xf32>, vector<128x128xf32>, vector<16x128xf32> -> vector<16x128xf32>
    %c1_23 = arith.constant 1 : index
    %c0_24 = arith.constant 0 : index
    %c0_25 = arith.constant 0 : index
    %24 = vector.load %arg6[%c1_23, %c0_24, %c0_25] : memref<3x128x128xf32, #tpu.memory_space<vmem>>, vector<1x128x128xf32>
    %25 = vector.shape_cast %24 : vector<1x128x128xf32> to vector<128x128xf32>
    %cst_26 = arith.constant dense<0.000000e+00> : vector<16x128xf32>
    %26 = tpu.matmul %20, %25, %cst_26 {dimension_numbers = #tpu.dot_dimension_numbers<[1], [0], [0], [1], [0, 0, 1, 1], [], []>} : vector<16x128xf32>, vector<128x128xf32>, vector<16x128xf32> -> vector<16x128xf32>
    %c2_27 = arith.constant 2 : index
    %c0_28 = arith.constant 0 : index
    %c0_29 = arith.constant 0 : index
    %27 = vector.load %arg6[%c2_27, %c0_28, %c0_29] : memref<3x128x128xf32, #tpu.memory_space<vmem>>, vector<1x128x128xf32>
    %28 = vector.shape_cast %27 : vector<1x128x128xf32> to vector<128x128xf32>
    %cst_30 = arith.constant dense<0.000000e+00> : vector<16x128xf32>
    %29 = tpu.matmul %20, %28, %cst_30 {dimension_numbers = #tpu.dot_dimension_numbers<[1], [0], [0], [1], [0, 0, 1, 1], [], []>} : vector<16x128xf32>, vector<128x128xf32>, vector<16x128xf32> -> vector<16x128xf32>
    %30 = tpu.concatenate %23, %26, %29 in 0 : vector<16x128xf32>, vector<16x128xf32>, vector<16x128xf32> -> vector<48x128xf32>
    %c0_31 = arith.constant 0 : index
    %c0_32 = arith.constant 0 : index
    %31 = vector.load %arg7[%c0_31, %c0_32] : memref<128x128xf32, #tpu.memory_space<vmem>>, vector<128x128xf32>
    %cst_33 = arith.constant dense<0.000000e+00> : vector<16x128xf32>
    %32 = tpu.matmul %20, %31, %cst_33 {dimension_numbers = #tpu.dot_dimension_numbers<[1], [0], [0], [1], [0, 0, 1, 1], [], []>} : vector<16x128xf32>, vector<128x128xf32>, vector<16x128xf32> -> vector<16x128xf32>
    %c0_34 = arith.constant 0 : index
    %c0_35 = arith.constant 0 : index
    %33 = vector.load %arg8[%c0_34, %c0_35] : memref<1x128xf32, #tpu.memory_space<vmem>>, vector<1x128xf32>
    %34 = vector.broadcast %33 : vector<1x128xf32> to vector<16x128xf32>
    %35 = arith.addf %32, %34 : vector<16x128xf32>
    %cst_36 = arith.constant dense<0.000000e+00> : vector<16x128xf32>
    %36 = tpu.matmul %0, %30, %cst_36 {dimension_numbers = #tpu.dot_dimension_numbers<[1], [0], [0], [1], [0, 0, 1, 1], [], []>} : vector<16x48xf32>, vector<48x128xf32>, vector<16x128xf32> -> vector<16x128xf32>
    %37 = arith.addf %35, %36 : vector<16x128xf32>
    %c0_37 = arith.constant 0 : index
    %c0_38 = arith.constant 0 : index
    %38 = vector.load %arg9[%c0_37, %c0_38] : memref<16x128xf32, #tpu.memory_space<vmem>>, vector<16x128xf32>
    tpu.vector_store %arg9[%c0_37, %c0_38], %37 {strides = array<i32>} : memref<16x128xf32, #tpu.memory_space<vmem>>, vector<16x128xf32>,
    return
  }
  func.func @transform_0(%arg0: i32) -> (i32, i32) {
    %c0_i32 = arith.constant 0 : i32
    %c0_i32_0 = arith.constant 0 : i32
    %c0_i32_1 = arith.constant 0 : i32
    return %c0_i32, %c0_i32_0 : i32, i32
  }
  func.func @transform_1(%arg0: i32) -> (i32, i32) {
    %c0_i32 = arith.constant 0 : i32
    %c0_i32_0 = arith.constant 0 : i32
    %c0_i32_1 = arith.constant 0 : i32
    return %c0_i32, %c0_i32_0 : i32, i32
  }
  func.func @transform_2(%arg0: i32) -> (i32, i32, i32) {
    %c0_i32 = arith.constant 0 : i32
    %c0_i32_0 = arith.constant 0 : i32
    %c0_i32_1 = arith.constant 0 : i32
    %c0_i32_2 = arith.constant 0 : i32
    return %c0_i32, %c0_i32_0, %c0_i32_1 : i32, i32, i32
  }
  func.func @transform_3(%arg0: i32) -> (i32, i32) {
    %c0_i32 = arith.constant 0 : i32
    %c0_i32_0 = arith.constant 0 : i32
    %c0_i32_1 = arith.constant 0 : i32
    return %c0_i32, %c0_i32_0 : i32, i32
  }
  func.func @transform_4(%arg0: i32) -> (i32, i32) {
    %c0_i32 = arith.constant 0 : i32
    %c0_i32_0 = arith.constant 0 : i32
    %c0_i32_1 = arith.constant 0 : i32
    return %c0_i32, %c0_i32_0 : i32, i32
  }
  func.func @transform_5(%arg0: i32) -> (i32, i32, i32) {
    %c0_i32 = arith.constant 0 : i32
    %c0_i32_0 = arith.constant 0 : i32
    %c0_i32_1 = arith.constant 0 : i32
    %c0_i32_2 = arith.constant 0 : i32
    return %c0_i32, %c0_i32_0, %c0_i32_1 : i32, i32, i32
  }
  func.func @transform_6(%arg0: i32) -> (i32, i32) {
    %c0_i32 = arith.constant 0 : i32
    %c0_i32_0 = arith.constant 0 : i32
    %c0_i32_1 = arith.constant 0 : i32
    return %c0_i32, %c0_i32_0 : i32, i32
  }
  func.func @transform_7(%arg0: i32) -> (i32, i32) {
    %c0_i32 = arith.constant 0 : i32
    %c0_i32_0 = arith.constant 0 : i32
    %c0_i32_1 = arith.constant 0 : i32
    return %c0_i32, %c0_i32_0 : i32, i32
  }
  func.func @transform_8(%arg0: i32) -> (i32, i32) {
    %c0_i32 = arith.constant 0 : i32
    %c0_i32_0 = arith.constant 0 : i32
    %c0_i32_1 = arith.constant 0 : i32
    return %c0_i32, %c0_i32_0 : i32, i32
  }
}

</mosaic_0001>

<llo_original>
// kernel: tpu_custom_call.1
$region0: #{tpu_custom_call.1}
  #allocation0 [shape = 'u32[]', space=smem, size = 0x4, offset = 0x4, fixed_abs, tag = 'smem constant byte address 0x4 - core index']
  #allocation1 [shape = 'u32[144,128]{1,0:T(1,128)}', space=vmem, size = 0x12000, scoped, tag = 'internal scratch']
  %s0 = inlined_call_operand.hbm [shape: f32[16,48], index: 0, kind: input, shape index: {}]
  %s1 = inlined_call_operand.hbm [shape: f32[16,128], index: 1, kind: input, shape index: {}]
  %s2 = inlined_call_operand.hbm [shape: f32[3,128,128], index: 2, kind: input, shape index: {}]
  %s3 = inlined_call_operand.hbm [shape: f32[128,128], index: 3, kind: input, shape index: {}]
  %s4 = inlined_call_operand.vmem [shape: f32[1,128], index: 4, kind: input, shape index: {}]
  %s5 = inlined_call_operand.hbm [shape: f32[3,128,128], index: 5, kind: input, shape index: {}]
  %s6 = inlined_call_operand.hbm [shape: f32[128,128], index: 6, kind: input, shape index: {}]
  %s7 = inlined_call_operand.vmem [shape: f32[1,128], index: 7, kind: input, shape index: {}]
  %s8 = inlined_call_operand.hbm [shape: f32[16,128], index: 8, kind: output, shape index: {}]
  %s9 = sld [smem:[#allocation0]]
  $region66: #{tpu_custom_call.1} parent=0
    _
  %s11 = ssub.s32 1, %s9
  %s12 = scalar_select 0, %s11, %s9
  $region1: #{tpu_custom_call.1} parent=0
    #allocation2 [shape = 'u8[8192]{0}', space=vmem, size = 0x2000, scoped, tag = 'input window, operand 0, single buffered']
    #allocation3 [shape = 's32[1]{0}', space=sflag, size = 0x4, scoped, tag = 'scoped memory for tpu_custom_call.1']
    #allocation4 [shape = 's32[1]{0}', space=sflag, size = 0x4, scoped, tag = 'scoped memory for tpu_custom_call.1']
    #allocation5 [shape = 'u8[8192]{0}', space=vmem, size = 0x2000, scoped, tag = 'input window, operand 1, single buffered']
    #allocation6 [shape = 's32[1]{0}', space=sflag, size = 0x4, scoped, tag = 'scoped memory for tpu_custom_call.1']
    #allocation7 [shape = 'u8[196608]{0}', space=vmem, size = 0x30000, scoped, tag = 'input window, operand 2, single buffered']
    #allocation8 [shape = 'u8[65536]{0}', space=vmem, size = 0x10000, scoped, tag = 'input window, operand 3, single buffered']
    #allocation9 [shape = 's32[1]{0}', space=sflag, size = 0x4, scoped, tag = 'scoped memory for tpu_custom_call.1']
    #allocation10 [shape = 'u8[196608]{0}', space=vmem, size = 0x30000, scoped, tag = 'input window, operand 5, single buffered']
    #allocation11 [shape = 'u8[65536]{0}', space=vmem, size = 0x10000, scoped, tag = 'input window, operand 6, single buffered']
    #allocation12 [shape = 's32[1]{0}', space=sflag, size = 0x4, scoped, tag = 'scoped memory for tpu_custom_call.1']
    #allocation13 [shape = 'u8[8192]{0}', space=vmem, size = 0x2000, scoped, tag = 'output window, operand 0, single buffered']
    %13 = vsyncpa [#allocation3], 0
    %14 = vsyncpa [#allocation6], 0
    %15 = vsyncpa [#allocation9], 0
    %16 = vsyncpa [#allocation12], 0
    %17 = vsyncpa [#allocation4], 0
    // Predicated region
    $region2: #{tpu_custom_call.1} parent=1 // pred_check
      _
    $region3: #{tpu_custom_call.1} parent=1 // pred_check_branch
      %19 = sbr.rel (0) target = $region5
    $region4: #{tpu_custom_call.1} parent=1 // pred_region
      %s21 = ssub.s32 256, 256
      %22 = vsyncadd [#allocation3], %s21
      %s23 = sshll.u32 [#allocation2], 4
      %s24 = int_to_ptr.vmem [resolvable:$true] %s23
      %29 = dma.hbm_to_vmem [thread:$0]  %s0, 256, %s24, [#allocation3], 128, 128, 8
    $region5: #{tpu_custom_call.1} parent=1 // pred_fallthru
      _
    // Predicated region
    $region6: #{tpu_custom_call.1} parent=1 // pred_check
      _
    $region7: #{tpu_custom_call.1} parent=1 // pred_check_branch
      %31 = sbr.rel (0) target = $region9
    $region8: #{tpu_custom_call.1} parent=1 // pred_region
      %s33 = ssub.s32 256, 256
      %34 = vsyncadd [#allocation6], %s33
      %s35 = sshll.u32 [#allocation5], 4
      %s36 = int_to_ptr.vmem [resolvable:$true] %s35
      %41 = dma.hbm_to_vmem [thread:$0]  %s1, 256, %s36, [#allocation6], 128, 128, 8
    $region9: #{tpu_custom_call.1} parent=1 // pred_fallthru
      _
    // Predicated region
    $region10: #{tpu_custom_call.1} parent=1 // pred_check
      _
    $region11: #{tpu_custom_call.1} parent=1 // pred_check_branch
      %43 = sbr.rel (0) target = $region13
    $region12: #{tpu_custom_call.1} parent=1 // pred_region
      %s45 = ssub.s32 6144, 6144
      %46 = vsyncadd [#allocation6], %s45
      %s47 = sshll.u32 [#allocation7], 4
      %s48 = int_to_ptr.vmem [resolvable:$true] %s47
      %53 = dma.hbm_to_vmem [thread:$0]  %s2, 6144, %s48, [#allocation6], 128, 128, 8
    $region13: #{tpu_custom_call.1} parent=1 // pred_fallthru
      _
    // Predicated region
    $region14: #{tpu_custom_call.1} parent=1 // pred_check
      _
    $region15: #{tpu_custom_call.1} parent=1 // pred_check_branch
      %55 = sbr.rel (0) target = $region17
    $region16: #{tpu_custom_call.1} parent=1 // pred_region
      %s57 = ssub.s32 2048, 2048
      %58 = vsyncadd [#allocation9], %s57
      %s59 = sshll.u32 [#allocation8], 4
      %s60 = int_to_ptr.vmem [resolvable:$true] %s59
      %65 = dma.hbm_to_vmem [thread:$0]  %s3, 2048, %s60, [#allocation9], 128, 128, 8
    $region17: #{tpu_custom_call.1} parent=1 // pred_fallthru
      _
    // Predicated region
    $region18: #{tpu_custom_call.1} parent=1 // pred_check
      _
    $region19: #{tpu_custom_call.1} parent=1 // pred_check_branch
      %67 = sbr.rel (0) target = $region21
    $region20: #{tpu_custom_call.1} parent=1 // pred_region
      _
    $region21: #{tpu_custom_call.1} parent=1 // pred_fallthru
      _
    // Predicated region
    $region22: #{tpu_custom_call.1} parent=1 // pred_check
      _
    $region23: #{tpu_custom_call.1} parent=1 // pred_check_branch
      %69 = sbr.rel (0) target = $region25
    $region24: #{tpu_custom_call.1} parent=1 // pred_region
      %s71 = ssub.s32 6144, 6144
      %72 = vsyncadd [#allocation9], %s71
      %s73 = sshll.u32 [#allocation10], 4
      %s74 = int_to_ptr.vmem [resolvable:$true] %s73
      %79 = dma.hbm_to_vmem [thread:$0]  %s5, 6144, %s74, [#allocation9], 128, 128, 8
    $region25: #{tpu_custom_call.1} parent=1 // pred_fallthru
      _
    // Predicated region
    $region26: #{tpu_custom_call.1} parent=1 // pred_check
      _
    $region27: #{tpu_custom_call.1} parent=1 // pred_check_branch
      %81 = sbr.rel (0) target = $region29
    $region28: #{tpu_custom_call.1} parent=1 // pred_region
      %s83 = ssub.s32 2048, 2048
      %84 = vsyncadd [#allocation12], %s83
      %s85 = sshll.u32 [#allocation11], 4
      %s86 = int_to_ptr.vmem [resolvable:$true] %s85
      %91 = dma.hbm_to_vmem [thread:$0]  %s6, 2048, %s86, [#allocation12], 128, 128, 8
    $region29: #{tpu_custom_call.1} parent=1 // pred_fallthru
      _
    // Predicated region
    $region30: #{tpu_custom_call.1} parent=1 // pred_check
      _
    $region31: #{tpu_custom_call.1} parent=1 // pred_check_branch
      %93 = sbr.rel (0) target = $region33
    $region32: #{tpu_custom_call.1} parent=1 // pred_region
      _
    $region33: #{tpu_custom_call.1} parent=1 // pred_fallthru
      _
    // Predicated region
    $region34: #{tpu_custom_call.1} parent=1 // pred_check
      _
    $region35: #{tpu_custom_call.1} parent=1 // pred_check_branch
      %95 = sbr.rel (0) target = $region37
    $region36: #{tpu_custom_call.1} parent=1 // pred_region
      %96 = dma.done [#allocation3], 256
    $region37: #{tpu_custom_call.1} parent=1 // pred_fallthru
      _
    // Predicated region
    $region38: #{tpu_custom_call.1} parent=1 // pred_check
      _
    $region39: #{tpu_custom_call.1} parent=1 // pred_check_branch
      %98 = sbr.rel (0) target = $region41
    $region40: #{tpu_custom_call.1} parent=1 // pred_region
      %99 = dma.done [#allocation6], 256
    $region41: #{tpu_custom_call.1} parent=1 // pred_fallthru
      _
    // Predicated region
    $region42: #{tpu_custom_call.1} parent=1 // pred_check
      _
    $region43: #{tpu_custom_call.1} parent=1 // pred_check_branch
      %101 = sbr.rel (0) target = $region45
    $region44: #{tpu_custom_call.1} parent=1 // pred_region
      %102 = dma.done [#allocation6], 6144
    $region45: #{tpu_custom_call.1} parent=1 // pred_fallthru
      _
    // Predicated region
    $region46: #{tpu_custom_call.1} parent=1 // pred_check
      _
    $region47: #{tpu_custom_call.1} parent=1 // pred_check_branch
      %104 = sbr.rel (0) target = $region49
    $region48: #{tpu_custom_call.1} parent=1 // pred_region
      %105 = dma.done [#allocation9], 2048
    $region49: #{tpu_custom_call.1} parent=1 // pred_fallthru
      _
    // Predicated region
    $region50: #{tpu_custom_call.1} parent=1 // pred_check
      _
    $region51: #{tpu_custom_call.1} parent=1 // pred_check_branch
      %107 = sbr.rel (0) target = $region53
    $region52: #{tpu_custom_call.1} parent=1 // pred_region
      %108 = dma.done [#allocation9], 6144
    $region53: #{tpu_custom_call.1} parent=1 // pred_fallthru
      _
    // Predicated region
    $region54: #{tpu_custom_call.1} parent=1 // pred_check
      _
    $region55: #{tpu_custom_call.1} parent=1 // pred_check_branch
      %110 = sbr.rel (0) target = $region57
    $region56: #{tpu_custom_call.1} parent=1 // pred_region
      %111 = dma.done [#allocation12], 2048
    $region57: #{tpu_custom_call.1} parent=1 // pred_fallthru
      _
    %v112 = vld [vmem:[#allocation2] sm:$0xff]
    %v113 = vld [vmem:[#allocation2 + $0x8] sm:$0xff]
    %v114 = vld [vmem:[#allocation5] sm:$0xff]
    %v115 = vld [vmem:[#allocation5 + $0x8] sm:$0xff]
    %v116 = vld [vmem:[#allocation7] sm:$0xff]
    %v117 = vld [vmem:[#allocation7 + $0x8] sm:$0xff]
    %v118 = vld [vmem:[#allocation7 + $0x10] sm:$0xff]
    %v119 = vld [vmem:[#allocation7 + $0x18] sm:$0xff]
    %v120 = vld [vmem:[#allocation7 + $0x20] sm:$0xff]
    %v121 = vld [vmem:[#allocation7 + $0x28] sm:$0xff]
    %v122 = vld [vmem:[#allocation7 + $0x30] sm:$0xff]
    %v123 = vld [vmem:[#allocation7 + $0x38] sm:$0xff]
    %v124 = vld [vmem:[#allocation7 + $0x40] sm:$0xff]
    %v125 = vld [vmem:[#allocation7 + $0x48] sm:$0xff]
    %v126 = vld [vmem:[#allocation7 + $0x50] sm:$0xff]
    %v127 = vld [vmem:[#allocation7 + $0x58] sm:$0xff]
    %v128 = vld [vmem:[#allocation7 + $0x60] sm:$0xff]
    %v129 = vld [vmem:[#allocation7 + $0x68] sm:$0xff]
    %v130 = vld [vmem:[#allocation7 + $0x70] sm:$0xff]
    %v131 = vld [vmem:[#allocation7 + $0x78] sm:$0xff]
    %132 = vmatprep.subr.mxu0 0.0
    %133 = vmatpush1.msra.mxu0 %v131
    %134 = vmatprep.subr.mxu0 0.0
    %135 = vmatpush1.msra.mxu0 %v130
    %136 = vmatprep.subr.mxu0 0.0
    %137 = vmatpush1.msra.mxu0 %v129
    %138 = vmatprep.subr.mxu0 0.0
    %139 = vmatpush1.msra.mxu0 %v128
    %140 = vmatprep.subr.mxu0 0.0
    %141 = vmatpush1.msra.mxu0 %v127
    %142 = vmatprep.subr.mxu0 0.0
    %143 = vmatpush1.msra.mxu0 %v126
    %144 = vmatprep.subr.mxu0 0.0
    %145 = vmatpush1.msra.mxu0 %v125
    %146 = vmatprep.subr.mxu0 0.0
    %147 = vmatpush1.msra.mxu0 %v124
    %148 = vmatprep.subr.mxu0 0.0
    %149 = vmatpush1.msra.mxu0 %v123
    %150 = vmatprep.subr.mxu0 0.0
    %151 = vmatpush1.msra.mxu0 %v122
    %152 = vmatprep.subr.mxu0 0.0
    %153 = vmatpush1.msra.mxu0 %v121
    %154 = vmatprep.subr.mxu0 0.0
    %155 = vmatpush1.msra.mxu0 %v120
    %156 = vmatprep.subr.mxu0 0.0
    %157 = vmatpush1.msra.mxu0 %v119
    %158 = vmatprep.subr.mxu0 0.0
    %159 = vmatpush1.msra.mxu0 %v118
    %160 = vmatprep.subr.mxu0 0.0
    %161 = vmatpush1.msra.mxu0 %v117
    %162 = vmatprep.subr.mxu0 0.0
    %163 = vmatpush1.msra.mxu0 %v116
    %164 = vmatprep.subr.mxu0 0.0
    %165 = vmatpush2.msra.mxu0 0.0
    %166 = vmatprep.subr.mxu0 0.0
    %167 = vmatpush2.msra.mxu0 0.0
    %168 = vmatprep.subr.mxu0 0.0
    %169 = vmatpush2.msra.mxu0 0.0
    %170 = vmatprep.subr.mxu0 0.0
    %171 = vmatpush2.msra.mxu0 0.0
    %172 = vmatprep.subr.mxu0 0.0
    %173 = vmatpush2.msra.mxu0 0.0
    %174 = vmatprep.subr.mxu0 0.0
    %175 = vmatpush2.msra.mxu0 0.0
    %176 = vmatprep.subr.mxu0 0.0
    %177 = vmatpush2.msra.mxu0 0.0
    %178 = vmatprep.subr.mxu0 0.0
    %179 = vmatpush2.msra.mxu0 0.0
    %180 = vmatprep.subr.mxu0 0.0
    %181 = vmatpush2.msra.mxu0 0.0
    %182 = vmatprep.subr.mxu0 0.0
    %183 = vmatpush2.msra.mxu0 0.0
    %184 = vmatprep.subr.mxu0 0.0
    %185 = vmatpush2.msra.mxu0 0.0
    %186 = vmatprep.subr.mxu0 0.0
    %187 = vmatpush2.msra.mxu0 0.0
    %188 = vmatprep.subr.mxu0 0.0
    %189 = vmatpush2.msra.mxu0 0.0
    %190 = vmatprep.subr.mxu0 0.0
    %191 = vmatpush2.msra.mxu0 0.0
    %192 = vmatprep.subr.mxu0 0.0
    %193 = vmatpush2.msra.mxu0 0.0
    %194 = vmatprep.subr.mxu0 0.0
    %195 = vmatpush2.msra.mxu0 0.0
    %196 = vmatprep.mubr.f32.mxu0 0.0
    %197 = vmatmul.mubr.f32.gmra.mxu0 %v114
    %v198 = vpop.f32.mrf.mxu0
    %v199 = vadd.f32 0.0, %v198
    %v200 = vpop.f32.mrf.mxu0
    %201 = vmatprep.mubr.f32.mxu0 0.0
    %202 = vmatmul.mubr.f32.gmra.mxu0 %v115
    %v203 = vpop.f32.mrf.mxu0
    %v204 = vadd.f32 0.0, %v203
    %v205 = vpop.f32.mrf.mxu0
    %206 = vdwg.mxu0
    %s207 = scalar_lea.vmem [#allocation7], 128
    %v208 = vld [vmem:[%s207] sm:$0xff]
    %v209 = vld [vmem:[%s207 + $0x8] sm:$0xff]
    %v210 = vld [vmem:[%s207 + $0x10] sm:$0xff]
    %v211 = vld [vmem:[%s207 + $0x18] sm:$0xff]
    %v212 = vld [vmem:[%s207 + $0x20] sm:$0xff]
    %v213 = vld [vmem:[%s207 + $0x28] sm:$0xff]
    %v214 = vld [vmem:[%s207 + $0x30] sm:$0xff]
    %v215 = vld [vmem:[%s207 + $0x38] sm:$0xff]
    %v216 = vld [vmem:[%s207 + $0x40] sm:$0xff]
    %v217 = vld [vmem:[%s207 + $0x48] sm:$0xff]
    %v218 = vld [vmem:[%s207 + $0x50] sm:$0xff]
    %v219 = vld [vmem:[%s207 + $0x58] sm:$0xff]
    %v220 = vld [vmem:[%s207 + $0x60] sm:$0xff]
    %v221 = vld [vmem:[%s207 + $0x68] sm:$0xff]
    %v222 = vld [vmem:[%s207 + $0x70] sm:$0xff]
    %v223 = vld [vmem:[%s207 + $0x78] sm:$0xff]
    %224 = vmatprep.subr.mxu0 0.0
    %225 = vmatpush1.msra.mxu0 %v223
    %226 = vmatprep.subr.mxu0 0.0
    %227 = vmatpush1.msra.mxu0 %v222
    %228 = vmatprep.subr.mxu0 0.0
    %229 = vmatpush1.msra.mxu0 %v221
    %230 = vmatprep.subr.mxu0 0.0
    %231 = vmatpush1.msra.mxu0 %v220
    %232 = vmatprep.subr.mxu0 0.0
    %233 = vmatpush1.msra.mxu0 %v219
    %234 = vmatprep.subr.mxu0 0.0
    %235 = vmatpush1.msra.mxu0 %v218
    %236 = vmatprep.subr.mxu0 0.0
    %237 = vmatpush1.msra.mxu0 %v217
    %238 = vmatprep.subr.mxu0 0.0
    %239 = vmatpush1.msra.mxu0 %v216
    %240 = vmatprep.subr.mxu0 0.0
    %241 = vmatpush1.msra.mxu0 %v215
    %242 = vmatprep.subr.mxu0 0.0
    %243 = vmatpush1.msra.mxu0 %v214
    %244 = vmatprep.subr.mxu0 0.0
    %245 = vmatpush1.msra.mxu0 %v213
    %246 = vmatprep.subr.mxu0 0.0
    %247 = vmatpush1.msra.mxu0 %v212
    %248 = vmatprep.subr.mxu0 0.0
    %249 = vmatpush1.msra.mxu0 %v211
    %250 = vmatprep.subr.mxu0 0.0
    %251 = vmatpush1.msra.mxu0 %v210
    %252 = vmatprep.subr.mxu0 0.0
    %253 = vmatpush1.msra.mxu0 %v209
    %254 = vmatprep.subr.mxu0 0.0
    %255 = vmatpush1.msra.mxu0 %v208
    %256 = vmatprep.subr.mxu0 0.0
    %257 = vmatpush2.msra.mxu0 0.0
    %258 = vmatprep.subr.mxu0 0.0
    %259 = vmatpush2.msra.mxu0 0.0
    %260 = vmatprep.subr.mxu0 0.0
    %261 = vmatpush2.msra.mxu0 0.0
    %262 = vmatprep.subr.mxu0 0.0
    %263 = vmatpush2.msra.mxu0 0.0
    %264 = vmatprep.subr.mxu0 0.0
    %265 = vmatpush2.msra.mxu0 0.0
    %266 = vmatprep.subr.mxu0 0.0
    %267 = vmatpush2.msra.mxu0 0.0
    %268 = vmatprep.subr.mxu0 0.0
    %269 = vmatpush2.msra.mxu0 0.0
    %270 = vmatprep.subr.mxu0 0.0
    %271 = vmatpush2.msra.mxu0 0.0
    %272 = vmatprep.subr.mxu0 0.0
    %273 = vmatpush2.msra.mxu0 0.0
    %274 = vmatprep.subr.mxu0 0.0
    %275 = vmatpush2.msra.mxu0 0.0
    %276 = vmatprep.subr.mxu0 0.0
    %277 = vmatpush2.msra.mxu0 0.0
    %278 = vmatprep.subr.mxu0 0.0
    %279 = vmatpush2.msra.mxu0 0.0
    %280 = vmatprep.subr.mxu0 0.0
    %281 = vmatpush2.msra.mxu0 0.0
    %282 = vmatprep.subr.mxu0 0.0
    %283 = vmatpush2.msra.mxu0 0.0
    %284 = vmatprep.subr.mxu0 0.0
    %285 = vmatpush2.msra.mxu0 0.0
    %286 = vmatprep.subr.mxu0 0.0
    %287 = vmatpush2.msra.mxu0 0.0
    %288 = vmatprep.mubr.f32.mxu0 0.0
    %289 = vmatmul.mubr.f32.gmra.mxu0 %v114
    %v290 = vpop.f32.mrf.mxu0
    %v291 = vadd.f32 0.0, %v290
    %v292 = vpop.f32.mrf.mxu0
    %293 = vmatprep.mubr.f32.mxu0 0.0
    %294 = vmatmul.mubr.f32.gmra.mxu0 %v115
    %v295 = vpop.f32.mrf.mxu0
    %v296 = vadd.f32 0.0, %v295
    %v297 = vpop.f32.mrf.mxu0
    %298 = vdwg.mxu0
    %s299 = scalar_lea.vmem [#allocation7], 256
    %v300 = vld [vmem:[%s299] sm:$0xff]
    %v301 = vld [vmem:[%s299 + $0x8] sm:$0xff]
    %v302 = vld [vmem:[%s299 + $0x10] sm:$0xff]
    %v303 = vld [vmem:[%s299 + $0x18] sm:$0xff]
    %v304 = vld [vmem:[%s299 + $0x20] sm:$0xff]
    %v305 = vld [vmem:[%s299 + $0x28] sm:$0xff]
    %v306 = vld [vmem:[%s299 + $0x30] sm:$0xff]
    %v307 = vld [vmem:[%s299 + $0x38] sm:$0xff]
    %v308 = vld [vmem:[%s299 + $0x40] sm:$0xff]
    %v309 = vld [vmem:[%s299 + $0x48] sm:$0xff]
    %v310 = vld [vmem:[%s299 + $0x50] sm:$0xff]
    %v311 = vld [vmem:[%s299 + $0x58] sm:$0xff]
    %v312 = vld [vmem:[%s299 + $0x60] sm:$0xff]
    %v313 = vld [vmem:[%s299 + $0x68] sm:$0xff]
    %v314 = vld [vmem:[%s299 + $0x70] sm:$0xff]
    %v315 = vld [vmem:[%s299 + $0x78] sm:$0xff]
    %316 = vmatprep.subr.mxu0 0.0
    %317 = vmatpush1.msra.mxu0 %v315
    %318 = vmatprep.subr.mxu0 0.0
    %319 = vmatpush1.msra.mxu0 %v314
    %320 = vmatprep.subr.mxu0 0.0
    %321 = vmatpush1.msra.mxu0 %v313
    %322 = vmatprep.subr.mxu0 0.0
    %323 = vmatpush1.msra.mxu0 %v312
    %324 = vmatprep.subr.mxu0 0.0
    %325 = vmatpush1.msra.mxu0 %v311
    %326 = vmatprep.subr.mxu0 0.0
    %327 = vmatpush1.msra.mxu0 %v310
    %328 = vmatprep.subr.mxu0 0.0
    %329 = vmatpush1.msra.mxu0 %v309
    %330 = vmatprep.subr.mxu0 0.0
    %331 = vmatpush1.msra.mxu0 %v308
    %332 = vmatprep.subr.mxu0 0.0
    %333 = vmatpush1.msra.mxu0 %v307
    %334 = vmatprep.subr.mxu0 0.0
    %335 = vmatpush1.msra.mxu0 %v306
    %336 = vmatprep.subr.mxu0 0.0
    %337 = vmatpush1.msra.mxu0 %v305
    %338 = vmatprep.subr.mxu0 0.0
    %339 = vmatpush1.msra.mxu0 %v304
    %340 = vmatprep.subr.mxu0 0.0
    %341 = vmatpush1.msra.mxu0 %v303
    %342 = vmatprep.subr.mxu0 0.0
    %343 = vmatpush1.msra.mxu0 %v302
    %344 = vmatprep.subr.mxu0 0.0
    %345 = vmatpush1.msra.mxu0 %v301
    %346 = vmatprep.subr.mxu0 0.0
    %347 = vmatpush1.msra.mxu0 %v300
    %348 = vmatprep.subr.mxu0 0.0
    %349 = vmatpush2.msra.mxu0 0.0
    %350 = vmatprep.subr.mxu0 0.0
    %351 = vmatpush2.msra.mxu0 0.0
    %352 = vmatprep.subr.mxu0 0.0
    %353 = vmatpush2.msra.mxu0 0.0
    %354 = vmatprep.subr.mxu0 0.0
    %355 = vmatpush2.msra.mxu0 0.0
    %356 = vmatprep.subr.mxu0 0.0
    %357 = vmatpush2.msra.mxu0 0.0
    %358 = vmatprep.subr.mxu0 0.0
    %359 = vmatpush2.msra.mxu0 0.0
    %360 = vmatprep.subr.mxu0 0.0
    %361 = vmatpush2.msra.mxu0 0.0
    %362 = vmatprep.subr.mxu0 0.0
    %363 = vmatpush2.msra.mxu0 0.0
    %364 = vmatprep.subr.mxu0 0.0
    %365 = vmatpush2.msra.mxu0 0.0
    %366 = vmatprep.subr.mxu0 0.0
    %367 = vmatpush2.msra.mxu0 0.0
    %368 = vmatprep.subr.mxu0 0.0
    %369 = vmatpush2.msra.mxu0 0.0
    %370 = vmatprep.subr.mxu0 0.0
    %371 = vmatpush2.msra.mxu0 0.0
    %372 = vmatprep.subr.mxu0 0.0
    %373 = vmatpush2.msra.mxu0 0.0
    %374 = vmatprep.subr.mxu0 0.0
    %375 = vmatpush2.msra.mxu0 0.0
    %376 = vmatprep.subr.mxu0 0.0
    %377 = vmatpush2.msra.mxu0 0.0
    %378 = vmatprep.subr.mxu0 0.0
    %379 = vmatpush2.msra.mxu0 0.0
    %380 = vmatprep.mubr.f32.mxu0 0.0
    %381 = vmatmul.mubr.f32.gmra.mxu0 %v114
    %v382 = vpop.f32.mrf.mxu0
    %v383 = vadd.f32 0.0, %v382
    %v384 = vpop.f32.mrf.mxu0
    %385 = vmatprep.mubr.f32.mxu0 0.0
    %386 = vmatmul.mubr.f32.gmra.mxu0 %v115
    %v387 = vpop.f32.mrf.mxu0
    %v388 = vadd.f32 0.0, %v387
    %v389 = vpop.f32.mrf.mxu0
    %390 = vdwg.mxu0
    %v391 = vld [vmem:[#allocation8] sm:$0xff]
    %v392 = vld [vmem:[#allocation8 + $0x8] sm:$0xff]
    %v393 = vld [vmem:[#allocation8 + $0x10] sm:$0xff]
    %v394 = vld [vmem:[#allocation8 + $0x18] sm:$0xff]
    %v395 = vld [vmem:[#allocation8 + $0x20] sm:$0xff]
    %v396 = vld [vmem:[#allocation8 + $0x28] sm:$0xff]
    %v397 = vld [vmem:[#allocation8 + $0x30] sm:$0xff]
    %v398 = vld [vmem:[#allocation8 + $0x38] sm:$0xff]
    %v399 = vld [vmem:[#allocation8 + $0x40] sm:$0xff]
    %v400 = vld [vmem:[#allocation8 + $0x48] sm:$0xff]
    %v401 = vld [vmem:[#allocation8 + $0x50] sm:$0xff]
    %v402 = vld [vmem:[#allocation8 + $0x58] sm:$0xff]
    %v403 = vld [vmem:[#allocation8 + $0x60] sm:$0xff]
    %v404 = vld [vmem:[#allocation8 + $0x68] sm:$0xff]
    %v405 = vld [vmem:[#allocation8 + $0x70] sm:$0xff]
    %v406 = vld [vmem:[#allocation8 + $0x78] sm:$0xff]
    %v407 = vld [vmem:[%s4] sm:$0x1]
    %v409 = vlaneseq
    %v410 = vshrl.u32 %v409, 7
    %v411 = vsub.s32 0, %v410
    %v412 = vrot.slane %v407, %v411
    %414 = vmatprep.subr.mxu0 0.0
    %415 = vmatpush1.msra.mxu0 %v406
    %416 = vmatprep.subr.mxu0 0.0
    %417 = vmatpush1.msra.mxu0 %v405
    %418 = vmatprep.subr.mxu0 0.0
    %419 = vmatpush1.msra.mxu0 %v404
    %420 = vmatprep.subr.mxu0 0.0
    %421 = vmatpush1.msra.mxu0 %v403
    %422 = vmatprep.subr.mxu0 0.0
    %423 = vmatpush1.msra.mxu0 %v402
    %424 = vmatprep.subr.mxu0 0.0
    %425 = vmatpush1.msra.mxu0 %v401
    %426 = vmatprep.subr.mxu0 0.0
    %427 = vmatpush1.msra.mxu0 %v400
    %428 = vmatprep.subr.mxu0 0.0
    %429 = vmatpush1.msra.mxu0 %v399
    %430 = vmatprep.subr.mxu0 0.0
    %431 = vmatpush1.msra.mxu0 %v398
    %432 = vmatprep.subr.mxu0 0.0
    %433 = vmatpush1.msra.mxu0 %v397
    %434 = vmatprep.subr.mxu0 0.0
    %435 = vmatpush1.msra.mxu0 %v396
    %436 = vmatprep.subr.mxu0 0.0
    %437 = vmatpush1.msra.mxu0 %v395
    %438 = vmatprep.subr.mxu0 0.0
    %439 = vmatpush1.msra.mxu0 %v394
    %440 = vmatprep.subr.mxu0 0.0
    %441 = vmatpush1.msra.mxu0 %v393
    %442 = vmatprep.subr.mxu0 0.0
    %443 = vmatpush1.msra.mxu0 %v392
    %444 = vmatprep.subr.mxu0 0.0
    %445 = vmatpush1.msra.mxu0 %v391
    %446 = vmatprep.subr.mxu0 0.0
    %447 = vmatpush2.msra.mxu0 0.0
    %448 = vmatprep.subr.mxu0 0.0
    %449 = vmatpush2.msra.mxu0 0.0
    %450 = vmatprep.subr.mxu0 0.0
    %451 = vmatpush2.msra.mxu0 0.0
    %452 = vmatprep.subr.mxu0 0.0
    %453 = vmatpush2.msra.mxu0 0.0
    %454 = vmatprep.subr.mxu0 0.0
    %455 = vmatpush2.msra.mxu0 0.0
    %456 = vmatprep.subr.mxu0 0.0
    %457 = vmatpush2.msra.mxu0 0.0
    %458 = vmatprep.subr.mxu0 0.0
    %459 = vmatpush2.msra.mxu0 0.0
    %460 = vmatprep.subr.mxu0 0.0
    %461 = vmatpush2.msra.mxu0 0.0
    %462 = vmatprep.subr.mxu0 0.0
    %463 = vmatpush2.msra.mxu0 0.0
    %464 = vmatprep.subr.mxu0 0.0
    %465 = vmatpush2.msra.mxu0 0.0
    %466 = vmatprep.subr.mxu0 0.0
    %467 = vmatpush2.msra.mxu0 0.0
    %468 = vmatprep.subr.mxu0 0.0
    %469 = vmatpush2.msra.mxu0 0.0
    %470 = vmatprep.subr.mxu0 0.0
    %471 = vmatpush2.msra.mxu0 0.0
    %472 = vmatprep.subr.mxu0 0.0
    %473 = vmatpush2.msra.mxu0 0.0
    %474 = vmatprep.subr.mxu0 0.0
    %475 = vmatpush2.msra.mxu0 0.0
    %476 = vmatprep.subr.mxu0 0.0
    %477 = vmatpush2.msra.mxu0 0.0
    %478 = vmatprep.mubr.f32.mxu0 0.0
    %479 = vmatmul.mubr.f32.gmra.mxu0 %v114
    %v480 = vpop.f32.mrf.mxu0
    %v481 = vadd.f32 %v412, %v480
    %v482 = vpop.f32.mrf.mxu0
    %483 = vmatprep.mubr.f32.mxu0 0.0
    %484 = vmatmul.mubr.f32.gmra.mxu0 %v115
    %v485 = vpop.f32.mrf.mxu0
    %v486 = vadd.f32 %v412, %v485
    %v487 = vpop.f32.mrf.mxu0
    %488 = vdwg.mxu0
    %vm489 = vcmask 392192
    %v491 = vsel %vm489, %v112, 0
    %v494 = vsel %vm489, %v113, 0
    %496 = vmatprep.subr.mxu0 0.0
    %497 = vmatpush1.msra.mxu0 0.0
    %498 = vmatprep.subr.mxu0 0.0
    %499 = vmatpush1.msra.mxu0 0.0
    %500 = vmatprep.subr.mxu0 0.0
    %501 = vmatpush1.msra.mxu0 0.0
    %502 = vmatprep.subr.mxu0 0.0
    %503 = vmatpush1.msra.mxu0 0.0
    %504 = vmatprep.subr.mxu0 0.0
    %505 = vmatpush1.msra.mxu0 0.0
    %506 = vmatprep.subr.mxu0 0.0
    %507 = vmatpush1.msra.mxu0 0.0
    %508 = vmatprep.subr.mxu0 0.0
    %509 = vmatpush1.msra.mxu0 0.0
    %510 = vmatprep.subr.mxu0 0.0
    %511 = vmatpush1.msra.mxu0 0.0
    %512 = vmatprep.subr.mxu0 0.0
    %513 = vmatpush1.msra.mxu0 0.0
    %514 = vmatprep.subr.mxu0 0.0
    %515 = vmatpush1.msra.mxu0 0.0
    %516 = vmatprep.subr.mxu0 0.0
    %517 = vmatpush1.msra.mxu0 %v388
    %518 = vmatprep.subr.mxu0 0.0
    %519 = vmatpush1.msra.mxu0 %v383
    %520 = vmatprep.subr.mxu0 0.0
    %521 = vmatpush1.msra.mxu0 %v296
    %522 = vmatprep.subr.mxu0 0.0
    %523 = vmatpush1.msra.mxu0 %v291
    %524 = vmatprep.subr.mxu0 0.0
    %525 = vmatpush1.msra.mxu0 %v204
    %526 = vmatprep.subr.mxu0 0.0
    %527 = vmatpush1.msra.mxu0 %v199
    %528 = vmatprep.subr.mxu0 0.0
    %529 = vmatpush2.msra.mxu0 0.0
    %530 = vmatprep.subr.mxu0 0.0
    %531 = vmatpush2.msra.mxu0 0.0
    %532 = vmatprep.subr.mxu0 0.0
    %533 = vmatpush2.msra.mxu0 0.0
    %534 = vmatprep.subr.mxu0 0.0
    %535 = vmatpush2.msra.mxu0 0.0
    %536 = vmatprep.subr.mxu0 0.0
    %537 = vmatpush2.msra.mxu0 0.0
    %538 = vmatprep.subr.mxu0 0.0
    %539 = vmatpush2.msra.mxu0 0.0
    %540 = vmatprep.subr.mxu0 0.0
    %541 = vmatpush2.msra.mxu0 0.0
    %542 = vmatprep.subr.mxu0 0.0
    %543 = vmatpush2.msra.mxu0 0.0
    %544 = vmatprep.subr.mxu0 0.0
    %545 = vmatpush2.msra.mxu0 0.0
    %546 = vmatprep.subr.mxu0 0.0
    %547 = vmatpush2.msra.mxu0 0.0
    %548 = vmatprep.subr.mxu0 0.0
    %549 = vmatpush2.msra.mxu0 0.0
    %550 = vmatprep.subr.mxu0 0.0
    %551 = vmatpush2.msra.mxu0 0.0
    %552 = vmatprep.subr.mxu0 0.0
    %553 = vmatpush2.msra.mxu0 0.0
    %554 = vmatprep.subr.mxu0 0.0
    %555 = vmatpush2.msra.mxu0 0.0
    %556 = vmatprep.subr.mxu0 0.0
    %557 = vmatpush2.msra.mxu0 0.0
    %558 = vmatprep.subr.mxu0 0.0
    %559 = vmatpush2.msra.mxu0 0.0
    %560 = vmatprep.mubr.f32.mxu0 0.0
    %561 = vmatmul.mubr.f32.gmra.mxu0 %v491
    %v562 = vpop.f32.mrf.mxu0
    %v563 = vadd.f32 0.0, %v562
    %v564 = vpop.f32.mrf.mxu0
    %565 = vmatprep.mubr.f32.mxu0 0.0
    %566 = vmatmul.mubr.f32.gmra.mxu0 %v494
    %v567 = vpop.f32.mrf.mxu0
    %v568 = vadd.f32 0.0, %v567
    %v569 = vpop.f32.mrf.mxu0
    %570 = vdwg.mxu0
    %v571 = vadd.f32 %v481, %v563
    %v572 = vadd.f32 %v486, %v568
    %v573 = vmax.f32 %v571, 0.0
    %v574 = vmax.f32 %v572, 0.0
    %v575 = vld [vmem:[#allocation10] sm:$0xff]
    %v576 = vld [vmem:[#allocation10 + $0x8] sm:$0xff]
    %v577 = vld [vmem:[#allocation10 + $0x10] sm:$0xff]
    %v578 = vld [vmem:[#allocation10 + $0x18] sm:$0xff]
    %v579 = vld [vmem:[#allocation10 + $0x20] sm:$0xff]
    %v580 = vld [vmem:[#allocation10 + $0x28] sm:$0xff]
    %v581 = vld [vmem:[#allocation10 + $0x30] sm:$0xff]
    %v582 = vld [vmem:[#allocation10 + $0x38] sm:$0xff]
    %v583 = vld [vmem:[#allocation10 + $0x40] sm:$0xff]
    %v584 = vld [vmem:[#allocation10 + $0x48] sm:$0xff]
    %v585 = vld [vmem:[#allocation10 + $0x50] sm:$0xff]
    %v586 = vld [vmem:[#allocation10 + $0x58] sm:$0xff]
    %v587 = vld [vmem:[#allocation10 + $0x60] sm:$0xff]
    %v588 = vld [vmem:[#allocation10 + $0x68] sm:$0xff]
    %v589 = vld [vmem:[#allocation10 + $0x70] sm:$0xff]
    %v590 = vld [vmem:[#allocation10 + $0x78] sm:$0xff]
    %591 = vmatprep.subr.mxu0 0.0
    %592 = vmatpush1.msra.mxu0 %v590
    %593 = vmatprep.subr.mxu0 0.0
    %594 = vmatpush1.msra.mxu0 %v589
    %595 = vmatprep.subr.mxu0 0.0
    %596 = vmatpush1.msra.mxu0 %v588
    %597 = vmatprep.subr.mxu0 0.0
    %598 = vmatpush1.msra.mxu0 %v587
    %599 = vmatprep.subr.mxu0 0.0
    %600 = vmatpush1.msra.mxu0 %v586
    %601 = vmatprep.subr.mxu0 0.0
    %602 = vmatpush1.msra.mxu0 %v585
    %603 = vmatprep.subr.mxu0 0.0
    %604 = vmatpush1.msra.mxu0 %v584
    %605 = vmatprep.subr.mxu0 0.0
    %606 = vmatpush1.msra.mxu0 %v583
    %607 = vmatprep.subr.mxu0 0.0
    %608 = vmatpush1.msra.mxu0 %v582
    %609 = vmatprep.subr.mxu0 0.0
    %610 = vmatpush1.msra.mxu0 %v581
    %611 = vmatprep.subr.mxu0 0.0
    %612 = vmatpush1.msra.mxu0 %v580
    %613 = vmatprep.subr.mxu0 0.0
    %614 = vmatpush1.msra.mxu0 %v579
    %615 = vmatprep.subr.mxu0 0.0
    %616 = vmatpush1.msra.mxu0 %v578
    %617 = vmatprep.subr.mxu0 0.0
    %618 = vmatpush1.msra.mxu0 %v577
    %619 = vmatprep.subr.mxu0 0.0
    %620 = vmatpush1.msra.mxu0 %v576
    %621 = vmatprep.subr.mxu0 0.0
    %622 = vmatpush1.msra.mxu0 %v575
    %623 = vmatprep.subr.mxu0 0.0
    %624 = vmatpush2.msra.mxu0 0.0
    %625 = vmatprep.subr.mxu0 0.0
    %626 = vmatpush2.msra.mxu0 0.0
    %627 = vmatprep.subr.mxu0 0.0
    %628 = vmatpush2.msra.mxu0 0.0
    %629 = vmatprep.subr.mxu0 0.0
    %630 = vmatpush2.msra.mxu0 0.0
    %631 = vmatprep.subr.mxu0 0.0
    %632 = vmatpush2.msra.mxu0 0.0
    %633 = vmatprep.subr.mxu0 0.0
    %634 = vmatpush2.msra.mxu0 0.0
    %635 = vmatprep.subr.mxu0 0.0
    %636 = vmatpush2.msra.mxu0 0.0
    %637 = vmatprep.subr.mxu0 0.0
    %638 = vmatpush2.msra.mxu0 0.0
    %639 = vmatprep.subr.mxu0 0.0
    %640 = vmatpush2.msra.mxu0 0.0
    %641 = vmatprep.subr.mxu0 0.0
    %642 = vmatpush2.msra.mxu0 0.0
    %643 = vmatprep.subr.mxu0 0.0
    %644 = vmatpush2.msra.mxu0 0.0
    %645 = vmatprep.subr.mxu0 0.0
    %646 = vmatpush2.msra.mxu0 0.0
    %647 = vmatprep.subr.mxu0 0.0
    %648 = vmatpush2.msra.mxu0 0.0
    %649 = vmatprep.subr.mxu0 0.0
    %650 = vmatpush2.msra.mxu0 0.0
    %651 = vmatprep.subr.mxu0 0.0
    %652 = vmatpush2.msra.mxu0 0.0
    %653 = vmatprep.subr.mxu0 0.0
    %654 = vmatpush2.msra.mxu0 0.0
    %655 = vmatprep.mubr.f32.mxu0 0.0
    %656 = vmatmul.mubr.f32.gmra.mxu0 %v573
    %v657 = vpop.f32.mrf.mxu0
    %v658 = vadd.f32 0.0, %v657
    %v659 = vpop.f32.mrf.mxu0
    %660 = vmatprep.mubr.f32.mxu0 0.0
    %661 = vmatmul.mubr.f32.gmra.mxu0 %v574
    %v662 = vpop.f32.mrf.mxu0
    %v663 = vadd.f32 0.0, %v662
    %v664 = vpop.f32.mrf.mxu0
    %665 = vdwg.mxu0
    %s666 = scalar_lea.vmem [#allocation10], 128
    %v667 = vld [vmem:[%s666] sm:$0xff]
    %v668 = vld [vmem:[%s666 + $0x8] sm:$0xff]
    %v669 = vld [vmem:[%s666 + $0x10] sm:$0xff]
    %v670 = vld [vmem:[%s666 + $0x18] sm:$0xff]
    %v671 = vld [vmem:[%s666 + $0x20] sm:$0xff]
    %v672 = vld [vmem:[%s666 + $0x28] sm:$0xff]
    %v673 = vld [vmem:[%s666 + $0x30] sm:$0xff]
    %v674 = vld [vmem:[%s666 + $0x38] sm:$0xff]
    %v675 = vld [vmem:[%s666 + $0x40] sm:$0xff]
    %v676 = vld [vmem:[%s666 + $0x48] sm:$0xff]
    %v677 = vld [vmem:[%s666 + $0x50] sm:$0xff]
    %v678 = vld [vmem:[%s666 + $0x58] sm:$0xff]
    %v679 = vld [vmem:[%s666 + $0x60] sm:$0xff]
    %v680 = vld [vmem:[%s666 + $0x68] sm:$0xff]
    %v681 = vld [vmem:[%s666 + $0x70] sm:$0xff]
    %v682 = vld [vmem:[%s666 + $0x78] sm:$0xff]
    %683 = vmatprep.subr.mxu0 0.0
    %684 = vmatpush1.msra.mxu0 %v682
    %685 = vmatprep.subr.mxu0 0.0
    %686 = vmatpush1.msra.mxu0 %v681
    %687 = vmatprep.subr.mxu0 0.0
    %688 = vmatpush1.msra.mxu0 %v680
    %689 = vmatprep.subr.mxu0 0.0
    %690 = vmatpush1.msra.mxu0 %v679
    %691 = vmatprep.subr.mxu0 0.0
    %692 = vmatpush1.msra.mxu0 %v678
    %693 = vmatprep.subr.mxu0 0.0
    %694 = vmatpush1.msra.mxu0 %v677
    %695 = vmatprep.subr.mxu0 0.0
    %696 = vmatpush1.msra.mxu0 %v676
    %697 = vmatprep.subr.mxu0 0.0
    %698 = vmatpush1.msra.mxu0 %v675
    %699 = vmatprep.subr.mxu0 0.0
    %700 = vmatpush1.msra.mxu0 %v674
    %701 = vmatprep.subr.mxu0 0.0
    %702 = vmatpush1.msra.mxu0 %v673
    %703 = vmatprep.subr.mxu0 0.0
    %704 = vmatpush1.msra.mxu0 %v672
    %705 = vmatprep.subr.mxu0 0.0
    %706 = vmatpush1.msra.mxu0 %v671
    %707 = vmatprep.subr.mxu0 0.0
    %708 = vmatpush1.msra.mxu0 %v670
    %709 = vmatprep.subr.mxu0 0.0
    %710 = vmatpush1.msra.mxu0 %v669
    %711 = vmatprep.subr.mxu0 0.0
    %712 = vmatpush1.msra.mxu0 %v668
    %713 = vmatprep.subr.mxu0 0.0
    %714 = vmatpush1.msra.mxu0 %v667
    %715 = vmatprep.subr.mxu0 0.0
    %716 = vmatpush2.msra.mxu0 0.0
    %717 = vmatprep.subr.mxu0 0.0
    %718 = vmatpush2.msra.mxu0 0.0
    %719 = vmatprep.subr.mxu0 0.0
    %720 = vmatpush2.msra.mxu0 0.0
    %721 = vmatprep.subr.mxu0 0.0
    %722 = vmatpush2.msra.mxu0 0.0
    %723 = vmatprep.subr.mxu0 0.0
    %724 = vmatpush2.msra.mxu0 0.0
    %725 = vmatprep.subr.mxu0 0.0
    %726 = vmatpush2.msra.mxu0 0.0
    %727 = vmatprep.subr.mxu0 0.0
    %728 = vmatpush2.msra.mxu0 0.0
    %729 = vmatprep.subr.mxu0 0.0
    %730 = vmatpush2.msra.mxu0 0.0
    %731 = vmatprep.subr.mxu0 0.0
    %732 = vmatpush2.msra.mxu0 0.0
    %733 = vmatprep.subr.mxu0 0.0
    %734 = vmatpush2.msra.mxu0 0.0
    %735 = vmatprep.subr.mxu0 0.0
    %736 = vmatpush2.msra.mxu0 0.0
    %737 = vmatprep.subr.mxu0 0.0
    %738 = vmatpush2.msra.mxu0 0.0
    %739 = vmatprep.subr.mxu0 0.0
    %740 = vmatpush2.msra.mxu0 0.0
    %741 = vmatprep.subr.mxu0 0.0
    %742 = vmatpush2.msra.mxu0 0.0
    %743 = vmatprep.subr.mxu0 0.0
    %744 = vmatpush2.msra.mxu0 0.0
    %745 = vmatprep.subr.mxu0 0.0
    %746 = vmatpush2.msra.mxu0 0.0
    %747 = vmatprep.mubr.f32.mxu0 0.0
    %748 = vmatmul.mubr.f32.gmra.mxu0 %v573
    %v749 = vpop.f32.mrf.mxu0
    %v750 = vadd.f32 0.0, %v749
    %v751 = vpop.f32.mrf.mxu0
    %752 = vmatprep.mubr.f32.mxu0 0.0
    %753 = vmatmul.mubr.f32.gmra.mxu0 %v574
    %v754 = vpop.f32.mrf.mxu0
    %v755 = vadd.f32 0.0, %v754
    %v756 = vpop.f32.mrf.mxu0
    %757 = vdwg.mxu0
    %s758 = scalar_lea.vmem [#allocation10], 256
    %v759 = vld [vmem:[%s758] sm:$0xff]
    %v760 = vld [vmem:[%s758 + $0x8] sm:$0xff]
    %v761 = vld [vmem:[%s758 + $0x10] sm:$0xff]
    %v762 = vld [vmem:[%s758 + $0x18] sm:$0xff]
    %v763 = vld [vmem:[%s758 + $0x20] sm:$0xff]
    %v764 = vld [vmem:[%s758 + $0x28] sm:$0xff]
    %v765 = vld [vmem:[%s758 + $0x30] sm:$0xff]
    %v766 = vld [vmem:[%s758 + $0x38] sm:$0xff]
    %v767 = vld [vmem:[%s758 + $0x40] sm:$0xff]
    %v768 = vld [vmem:[%s758 + $0x48] sm:$0xff]
    %v769 = vld [vmem:[%s758 + $0x50] sm:$0xff]
    %v770 = vld [vmem:[%s758 + $0x58] sm:$0xff]
    %v771 = vld [vmem:[%s758 + $0x60] sm:$0xff]
    %v772 = vld [vmem:[%s758 + $0x68] sm:$0xff]
    %v773 = vld [vmem:[%s758 + $0x70] sm:$0xff]
    %v774 = vld [vmem:[%s758 + $0x78] sm:$0xff]
    %775 = vmatprep.subr.mxu0 0.0
    %776 = vmatpush1.msra.mxu0 %v774
    %777 = vmatprep.subr.mxu0 0.0
    %778 = vmatpush1.msra.mxu0 %v773
    %779 = vmatprep.subr.mxu0 0.0
    %780 = vmatpush1.msra.mxu0 %v772
    %781 = vmatprep.subr.mxu0 0.0
    %782 = vmatpush1.msra.mxu0 %v771
    %783 = vmatprep.subr.mxu0 0.0
    %784 = vmatpush1.msra.mxu0 %v770
    %785 = vmatprep.subr.mxu0 0.0
    %786 = vmatpush1.msra.mxu0 %v769
    %787 = vmatprep.subr.mxu0 0.0
    %788 = vmatpush1.msra.mxu0 %v768
    %789 = vmatprep.subr.mxu0 0.0
    %790 = vmatpush1.msra.mxu0 %v767
    %791 = vmatprep.subr.mxu0 0.0
    %792 = vmatpush1.msra.mxu0 %v766
    %793 = vmatprep.subr.mxu0 0.0
    %794 = vmatpush1.msra.mxu0 %v765
    %795 = vmatprep.subr.mxu0 0.0
    %796 = vmatpush1.msra.mxu0 %v764
    %797 = vmatprep.subr.mxu0 0.0
    %798 = vmatpush1.msra.mxu0 %v763
    %799 = vmatprep.subr.mxu0 0.0
    %800 = vmatpush1.msra.mxu0 %v762
    %801 = vmatprep.subr.mxu0 0.0
    %802 = vmatpush1.msra.mxu0 %v761
    %803 = vmatprep.subr.mxu0 0.0
    %804 = vmatpush1.msra.mxu0 %v760
    %805 = vmatprep.subr.mxu0 0.0
    %806 = vmatpush1.msra.mxu0 %v759
    %807 = vmatprep.subr.mxu0 0.0
    %808 = vmatpush2.msra.mxu0 0.0
    %809 = vmatprep.subr.mxu0 0.0
    %810 = vmatpush2.msra.mxu0 0.0
    %811 = vmatprep.subr.mxu0 0.0
    %812 = vmatpush2.msra.mxu0 0.0
    %813 = vmatprep.subr.mxu0 0.0
    %814 = vmatpush2.msra.mxu0 0.0
    %815 = vmatprep.subr.mxu0 0.0
    %816 = vmatpush2.msra.mxu0 0.0
    %817 = vmatprep.subr.mxu0 0.0
    %818 = vmatpush2.msra.mxu0 0.0
    %819 = vmatprep.subr.mxu0 0.0
    %820 = vmatpush2.msra.mxu0 0.0
    %821 = vmatprep.subr.mxu0 0.0
    %822 = vmatpush2.msra.mxu0 0.0
    %823 = vmatprep.subr.mxu0 0.0
    %824 = vmatpush2.msra.mxu0 0.0
    %825 = vmatprep.subr.mxu0 0.0
    %826 = vmatpush2.msra.mxu0 0.0
    %827 = vmatprep.subr.mxu0 0.0
    %828 = vmatpush2.msra.mxu0 0.0
    %829 = vmatprep.subr.mxu0 0.0
    %830 = vmatpush2.msra.mxu0 0.0
    %831 = vmatprep.subr.mxu0 0.0
    %832 = vmatpush2.msra.mxu0 0.0
    %833 = vmatprep.subr.mxu0 0.0
    %834 = vmatpush2.msra.mxu0 0.0
    %835 = vmatprep.subr.mxu0 0.0
    %836 = vmatpush2.msra.mxu0 0.0
    %837 = vmatprep.subr.mxu0 0.0
    %838 = vmatpush2.msra.mxu0 0.0
    %839 = vmatprep.mubr.f32.mxu0 0.0
    %840 = vmatmul.mubr.f32.gmra.mxu0 %v573
    %v841 = vpop.f32.mrf.mxu0
    %v842 = vadd.f32 0.0, %v841
    %v843 = vpop.f32.mrf.mxu0
    %844 = vmatprep.mubr.f32.mxu0 0.0
    %845 = vmatmul.mubr.f32.gmra.mxu0 %v574
    %v846 = vpop.f32.mrf.mxu0
    %v847 = vadd.f32 0.0, %v846
    %v848 = vpop.f32.mrf.mxu0
    %849 = vdwg.mxu0
    %v850 = vld [vmem:[#allocation11] sm:$0xff]
    %v851 = vld [vmem:[#allocation11 + $0x8] sm:$0xff]
    %v852 = vld [vmem:[#allocation11 + $0x10] sm:$0xff]
    %v853 = vld [vmem:[#allocation11 + $0x18] sm:$0xff]
    %v854 = vld [vmem:[#allocation11 + $0x20] sm:$0xff]
    %v855 = vld [vmem:[#allocation11 + $0x28] sm:$0xff]
    %v856 = vld [vmem:[#allocation11 + $0x30] sm:$0xff]
    %v857 = vld [vmem:[#allocation11 + $0x38] sm:$0xff]
    %v858 = vld [vmem:[#allocation11 + $0x40] sm:$0xff]
    %v859 = vld [vmem:[#allocation11 + $0x48] sm:$0xff]
    %v860 = vld [vmem:[#allocation11 + $0x50] sm:$0xff]
    %v861 = vld [vmem:[#allocation11 + $0x58] sm:$0xff]
    %v862 = vld [vmem:[#allocation11 + $0x60] sm:$0xff]
    %v863 = vld [vmem:[#allocation11 + $0x68] sm:$0xff]
    %v864 = vld [vmem:[#allocation11 + $0x70] sm:$0xff]
    %v865 = vld [vmem:[#allocation11 + $0x78] sm:$0xff]
    %v866 = vld [vmem:[%s7] sm:$0x1]
    %v868 = vlaneseq
    %v869 = vshrl.u32 %v868, 7
    %v870 = vsub.s32 0, %v869
    %v871 = vrot.slane %v866, %v870
    %873 = vmatprep.subr.mxu0 0.0
    %874 = vmatpush1.msra.mxu0 %v865
    %875 = vmatprep.subr.mxu0 0.0
    %876 = vmatpush1.msra.mxu0 %v864
    %877 = vmatprep.subr.mxu0 0.0
    %878 = vmatpush1.msra.mxu0 %v863
    %879 = vmatprep.subr.mxu0 0.0
    %880 = vmatpush1.msra.mxu0 %v862
    %881 = vmatprep.subr.mxu0 0.0
    %882 = vmatpush1.msra.mxu0 %v861
    %883 = vmatprep.subr.mxu0 0.0
    %884 = vmatpush1.msra.mxu0 %v860
    %885 = vmatprep.subr.mxu0 0.0
    %886 = vmatpush1.msra.mxu0 %v859
    %887 = vmatprep.subr.mxu0 0.0
    %888 = vmatpush1.msra.mxu0 %v858
    %889 = vmatprep.subr.mxu0 0.0
    %890 = vmatpush1.msra.mxu0 %v857
    %891 = vmatprep.subr.mxu0 0.0
    %892 = vmatpush1.msra.mxu0 %v856
    %893 = vmatprep.subr.mxu0 0.0
    %894 = vmatpush1.msra.mxu0 %v855
    %895 = vmatprep.subr.mxu0 0.0
    %896 = vmatpush1.msra.mxu0 %v854
    %897 = vmatprep.subr.mxu0 0.0
    %898 = vmatpush1.msra.mxu0 %v853
    %899 = vmatprep.subr.mxu0 0.0
    %900 = vmatpush1.msra.mxu0 %v852
    %901 = vmatprep.subr.mxu0 0.0
    %902 = vmatpush1.msra.mxu0 %v851
    %903 = vmatprep.subr.mxu0 0.0
    %904 = vmatpush1.msra.mxu0 %v850
    %905 = vmatprep.subr.mxu0 0.0
    %906 = vmatpush2.msra.mxu0 0.0
    %907 = vmatprep.subr.mxu0 0.0
    %908 = vmatpush2.msra.mxu0 0.0
    %909 = vmatprep.subr.mxu0 0.0
    %910 = vmatpush2.msra.mxu0 0.0
    %911 = vmatprep.subr.mxu0 0.0
    %912 = vmatpush2.msra.mxu0 0.0
    %913 = vmatprep.subr.mxu0 0.0
    %914 = vmatpush2.msra.mxu0 0.0
    %915 = vmatprep.subr.mxu0 0.0
    %916 = vmatpush2.msra.mxu0 0.0
    %917 = vmatprep.subr.mxu0 0.0
    %918 = vmatpush2.msra.mxu0 0.0
    %919 = vmatprep.subr.mxu0 0.0
    %920 = vmatpush2.msra.mxu0 0.0
    %921 = vmatprep.subr.mxu0 0.0
    %922 = vmatpush2.msra.mxu0 0.0
    %923 = vmatprep.subr.mxu0 0.0
    %924 = vmatpush2.msra.mxu0 0.0
    %925 = vmatprep.subr.mxu0 0.0
    %926 = vmatpush2.msra.mxu0 0.0
    %927 = vmatprep.subr.mxu0 0.0
    %928 = vmatpush2.msra.mxu0 0.0
    %929 = vmatprep.subr.mxu0 0.0
    %930 = vmatpush2.msra.mxu0 0.0
    %931 = vmatprep.subr.mxu0 0.0
    %932 = vmatpush2.msra.mxu0 0.0
    %933 = vmatprep.subr.mxu0 0.0
    %934 = vmatpush2.msra.mxu0 0.0
    %935 = vmatprep.subr.mxu0 0.0
    %936 = vmatpush2.msra.mxu0 0.0
    %937 = vmatprep.mubr.f32.mxu0 0.0
    %938 = vmatmul.mubr.f32.gmra.mxu0 %v573
    %v939 = vpop.f32.mrf.mxu0
    %v940 = vadd.f32 %v871, %v939
    %v941 = vpop.f32.mrf.mxu0
    %942 = vmatprep.mubr.f32.mxu0 0.0
    %943 = vmatmul.mubr.f32.gmra.mxu0 %v574
    %v944 = vpop.f32.mrf.mxu0
    %v945 = vadd.f32 %v871, %v944
    %v946 = vpop.f32.mrf.mxu0
    %947 = vdwg.mxu0
    %948 = vmatprep.subr.mxu0 0.0
    %949 = vmatpush1.msra.mxu0 0.0
    %950 = vmatprep.subr.mxu0 0.0
    %951 = vmatpush1.msra.mxu0 0.0
    %952 = vmatprep.subr.mxu0 0.0
    %953 = vmatpush1.msra.mxu0 0.0
    %954 = vmatprep.subr.mxu0 0.0
    %955 = vmatpush1.msra.mxu0 0.0
    %956 = vmatprep.subr.mxu0 0.0
    %957 = vmatpush1.msra.mxu0 0.0
    %958 = vmatprep.subr.mxu0 0.0
    %959 = vmatpush1.msra.mxu0 0.0
    %960 = vmatprep.subr.mxu0 0.0
    %961 = vmatpush1.msra.mxu0 0.0
    %962 = vmatprep.subr.mxu0 0.0
    %963 = vmatpush1.msra.mxu0 0.0
    %964 = vmatprep.subr.mxu0 0.0
    %965 = vmatpush1.msra.mxu0 0.0
    %966 = vmatprep.subr.mxu0 0.0
    %967 = vmatpush1.msra.mxu0 0.0
    %968 = vmatprep.subr.mxu0 0.0
    %969 = vmatpush1.msra.mxu0 %v847
    %970 = vmatprep.subr.mxu0 0.0
    %971 = vmatpush1.msra.mxu0 %v842
    %972 = vmatprep.subr.mxu0 0.0
    %973 = vmatpush1.msra.mxu0 %v755
    %974 = vmatprep.subr.mxu0 0.0
    %975 = vmatpush1.msra.mxu0 %v750
    %976 = vmatprep.subr.mxu0 0.0
    %977 = vmatpush1.msra.mxu0 %v663
    %978 = vmatprep.subr.mxu0 0.0
    %979 = vmatpush1.msra.mxu0 %v658
    %980 = vmatprep.subr.mxu0 0.0
    %981 = vmatpush2.msra.mxu0 0.0
    %982 = vmatprep.subr.mxu0 0.0
    %983 = vmatpush2.msra.mxu0 0.0
    %984 = vmatprep.subr.mxu0 0.0
    %985 = vmatpush2.msra.mxu0 0.0
    %986 = vmatprep.subr.mxu0 0.0
    %987 = vmatpush2.msra.mxu0 0.0
    %988 = vmatprep.subr.mxu0 0.0
    %989 = vmatpush2.msra.mxu0 0.0
    %990 = vmatprep.subr.mxu0 0.0
    %991 = vmatpush2.msra.mxu0 0.0
    %992 = vmatprep.subr.mxu0 0.0
    %993 = vmatpush2.msra.mxu0 0.0
    %994 = vmatprep.subr.mxu0 0.0
    %995 = vmatpush2.msra.mxu0 0.0
    %996 = vmatprep.subr.mxu0 0.0
    %997 = vmatpush2.msra.mxu0 0.0
    %998 = vmatprep.subr.mxu0 0.0
    %999 = vmatpush2.msra.mxu0 0.0
    %1000 = vmatprep.subr.mxu0 0.0
    %1001 = vmatpush2.msra.mxu0 0.0
    %1002 = vmatprep.subr.mxu0 0.0
    %1003 = vmatpush2.msra.mxu0 0.0
    %1004 = vmatprep.subr.mxu0 0.0
    %1005 = vmatpush2.msra.mxu0 0.0
    %1006 = vmatprep.subr.mxu0 0.0
    %1007 = vmatpush2.msra.mxu0 0.0
    %1008 = vmatprep.subr.mxu0 0.0
    %1009 = vmatpush2.msra.mxu0 0.0
    %1010 = vmatprep.subr.mxu0 0.0
    %1011 = vmatpush2.msra.mxu0 0.0
    %1012 = vmatprep.mubr.f32.mxu0 0.0
    %1013 = vmatmul.mubr.f32.gmra.mxu0 %v491
    %v1014 = vpop.f32.mrf.mxu0
    %v1015 = vadd.f32 0.0, %v1014
    %v1016 = vpop.f32.mrf.mxu0
    %1017 = vmatprep.mubr.f32.mxu0 0.0
    %1018 = vmatmul.mubr.f32.gmra.mxu0 %v494
    %v1019 = vpop.f32.mrf.mxu0
    %v1020 = vadd.f32 0.0, %v1019
    %v1021 = vpop.f32.mrf.mxu0
    %1022 = vdwg.mxu0
    %v1023 = vadd.f32 %v940, %v1015
    %v1024 = vadd.f32 %v945, %v1020
    %1025 = vst [vmem:[#allocation13] sm:$0xff] %v1023
    %1026 = vst [vmem:[#allocation13 + $0x8] sm:$0xff] %v1024
    // Predicated region
    $region58: #{tpu_custom_call.1} parent=1 // pred_check
      _
    $region59: #{tpu_custom_call.1} parent=1 // pred_check_branch
      %1028 = sbr.rel (0) target = $region61
    $region60: #{tpu_custom_call.1} parent=1 // pred_region
      %s1030 = ssub.s32 256, 256
      %1031 = vsyncadd [#allocation4], %s1030
      %s1032 = sshll.u32 [#allocation13], 4
      %s1033 = int_to_ptr.vmem [resolvable:$true] %s1032
      %1038 = dma.vmem_to_hbm [thread:$0]  %s1033, 256, %s8, [#allocation4], 128, 128, 8
    $region61: #{tpu_custom_call.1} parent=1 // pred_fallthru
      _
    // Predicated region
    $region62: #{tpu_custom_call.1} parent=1 // pred_check
      _
    $region63: #{tpu_custom_call.1} parent=1 // pred_check_branch
      %1040 = sbr.rel (0) target = $region65
    $region64: #{tpu_custom_call.1} parent=1 // pred_region
      %1041 = dma.done [#allocation4], 256
    $region65: #{tpu_custom_call.1} parent=1 // pred_fallthru
      _
    %1042 = vsyncpa [#allocation3], 1
    %1043 = vsyncpa [#allocation6], 1
    %1044 = vsyncpa [#allocation9], 1
    %1045 = vsyncpa [#allocation12], 1
    %1046 = vsyncpa [#allocation4], 1

</llo_original>
